<compile_context>
chip_gen: v7x
topology: tpu7x:2x2x1
jax: 0.10.0
libtpu: 0.0.40
codegen_flags: <defaults>
</compile_context>

<pallas_src>
import functools

import jax
import jax.numpy as jnp
from jax.experimental import pallas as pl
from jax.experimental.pallas import tpu as pltpu


def _eps_mse_kernel(x_ref, y_ref, o_ref, acc_ref, *,
                    epsilon, inv_n, total_rows, tile_rows, need_mask):
    """Accumulates sum(((x+eps)-(y+eps))^2) into a VMEM vector accumulator."""
    i = pl.program_id(0)

    @pl.when(i == 0)
    def _init():
        acc_ref[...] = jnp.zeros_like(acc_ref)

    x = x_ref[...].astype(jnp.float32) + jnp.float32(epsilon)
    y = y_ref[...].astype(jnp.float32) + jnp.float32(epsilon)
    d = x - y
    sq = d * d

    if need_mask:
        # Ragged last tile: rows past `total_rows` hold undefined data.
        row_ids = jax.lax.broadcasted_iota(jnp.int32, sq.shape, 0)
        global_rows = i * tile_rows + row_ids
        sq = jnp.where(global_rows < total_rows, sq, jnp.float32(0.0))

    acc_ref[...] += sq

    @pl.when(i == pl.num_programs(0) - 1)
    def _finalize():
        o_ref[0, 0] = jnp.sum(acc_ref[...]) * jnp.float32(inv_n)


def epsilon_mse_loss(inp, target, epsilon=1e-6, *, tile_rows=1024):
    """Pallas implementation of EpsilonMSELoss.forward(input, target)."""
    assert inp.shape == target.shape, "input/target must have identical shapes"
    n = inp.size
    LANE = 128

    xf = inp.reshape(-1)
    yf = target.reshape(-1)

    # Minimal lane-alignment pad (at most 127 elements), only when needed.
    # Zero padding contributes exactly 0 to the sum of squared differences.
    rem = n % LANE
    if rem:
        pad = LANE - rem
        xf = jnp.pad(xf, (0, pad))
        yf = jnp.pad(yf, (0, pad))

    x2 = xf.reshape(-1, LANE)  # lane-dense [rows, 128] view, native dtype
    y2 = yf.reshape(-1, LANE)
    rows = x2.shape[0]

    # Sublane packing granularity: 8 rows for 32-bit, 16 for bf16, 32 for i8.
    def _pack(dt):
        return max(1, 4 // jnp.dtype(dt).itemsize)

    sub = 8 * max(_pack(x2.dtype), _pack(y2.dtype))

    def _round_up(a, b):
        return ((a + b - 1) // b) * b

    tr = min(_round_up(tile_rows, sub), _round_up(rows, sub))
    grid = (pl.cdiv(rows, tr),)
    need_mask = (rows % tr) != 0

    kernel = functools.partial(
        _eps_mse_kernel,
        epsilon=float(epsilon),
        inv_n=1.0 / float(n),
        total_rows=rows,
        tile_rows=tr,
        need_mask=need_mask,
    )

    out = pl.pallas_call(
        kernel,
        out_shape=jax.ShapeDtypeStruct((1, 1), jnp.float32),
        grid_spec=pltpu.PrefetchScalarGridSpec(
            num_scalar_prefetch=0,
            grid=grid,
            in_specs=[
                pl.BlockSpec((tr, LANE), lambda i: (i, 0)),
                pl.BlockSpec((tr, LANE), lambda i: (i, 0)),
            ],
            out_specs=pl.BlockSpec(
                (1, 1), lambda i: (0, 0), memory_space=pltpu.SMEM
            ),
            scratch_shapes=[pltpu.VMEM((tr, LANE), jnp.float32)],
        ),
        compiler_params=pltpu.CompilerParams(
            dimension_semantics=("arbitrary",)
        ),
    )(x2, y2)

    return out[0, 0]


if __name__ == "__main__":
    eps = 1e-6
    key = jax.random.PRNGKey(0)

    # Shapes consistent with the source script: (batch=16, days=5, features=11).
    k1, k2, k3, k4 = jax.random.split(key, 4)
    pred = jax.random.normal(k1, (16, 5, 11), dtype=jnp.float32)
    targ = jax.random.normal(k2, (16, 5, 11), dtype=jnp.float32)

    loss = epsilon_mse_loss(pred, targ, epsilon=eps)
    loss = jax.block_until_ready(loss)
    ref = jnp.mean(((pred + eps) - (targ + eps)) ** 2)
    assert jnp.allclose(loss, ref, rtol=1e-5, atol=1e-6), (loss, ref)

    # Lane-aligned case (exercises the no-pad, no-mask fast path).
    a = jax.random.normal(k3, (4, 256), dtype=jnp.float32)
    b = jax.random.normal(k4, (4, 256), dtype=jnp.float32)
    loss2 = jax.block_until_ready(epsilon_mse_loss(a, b, epsilon=eps))
    ref2 = jnp.mean(((a + eps) - (b + eps)) ** 2)
    assert jnp.allclose(loss2, ref2, rtol=1e-5, atol=1e-6), (loss2, ref2)

    print("KERNEL_OK")
</pallas_src>

<mosaic_0001>
module attributes {stable_mosaic.version = 11 : i64} {
  func.func @_eps_mse_kernel(%arg0: i32, %arg1: memref<8x128xf32, #tpu.memory_space<vmem>>, %arg2: memref<8x128xf32, #tpu.memory_space<vmem>>, %arg3: memref<1x1xf32, #tpu.memory_space<smem>>, %arg4: memref<8x128xf32, #tpu.memory_space<vmem>>) attributes {dimension_semantics = [#tpu.dimension_semantics<arbitrary>], iteration_bounds = array<i64: 1>, scalar_prefetch = 0 : i64, scratch_operands = 1 : i64, tpu.core_type = #tpu.core_type<tc>, window_params = [{transform_indices = @transform_0, window_bounds = array<i64: 8, 128>}, {transform_indices = @transform_1, window_bounds = array<i64: 8, 128>}, {transform_indices = @transform_2, window_bounds = array<i64: 1, 1>}]} {
    %c0_i32 = arith.constant 0 : i32
    %0 = arith.cmpi eq, %arg0, %c0_i32 : i32
    %1 = arith.extui %0 : i1 to i32
    %c0_i32_0 = arith.constant 0 : i32
    %2 = arith.cmpi ne, %1, %c0_i32_0 : i32
    scf.if %2 {
      %cst_12 = arith.constant 0.000000e+00 : f32
      %25 = vector.broadcast %cst_12 : f32 to vector<8x128xf32>
      %c0_13 = arith.constant 0 : index
      %c0_14 = arith.constant 0 : index
      %26 = vector.load %arg4[%c0_13, %c0_14] : memref<8x128xf32, #tpu.memory_space<vmem>>, vector<8x128xf32>
      tpu.vector_store %arg4[%c0_13, %c0_14], %25 {strides = array<i32>} : memref<8x128xf32, #tpu.memory_space<vmem>>, vector<8x128xf32>,
    } else {
    }
    %c0 = arith.constant 0 : index
    %c0_1 = arith.constant 0 : index
    %3 = vector.load %arg1[%c0, %c0_1] : memref<8x128xf32, #tpu.memory_space<vmem>>, vector<8x128xf32>
    %cst = arith.constant 9.99999997E-7 : f32
    %4 = vector.broadcast %cst : f32 to vector<8x128xf32>
    %5 = arith.addf %3, %4 : vector<8x128xf32>
    %c0_2 = arith.constant 0 : index
    %c0_3 = arith.constant 0 : index
    %6 = vector.load %arg2[%c0_2, %c0_3] : memref<8x128xf32, #tpu.memory_space<vmem>>, vector<8x128xf32>
    %cst_4 = arith.constant 9.99999997E-7 : f32
    %7 = vector.broadcast %cst_4 : f32 to vector<8x128xf32>
    %8 = arith.addf %6, %7 : vector<8x128xf32>
    %9 = arith.subf %5, %8 : vector<8x128xf32>
    %10 = arith.mulf %9, %9 : vector<8x128xf32>
    %11 = tpu.iota {dimensions = array<i32: 0>} : vector<8x128xi32>
    %c8_i32 = arith.constant 8 : i32
    %12 = arith.muli %arg0, %c8_i32 : i32
    %13 = vector.broadcast %12 : i32 to vector<8x128xi32>
    %14 = arith.addi %13, %11 : vector<8x128xi32>
    %c7_i32 = arith.constant 7 : i32
    %15 = vector.broadcast %c7_i32 : i32 to vector<8x128xi32>
    %16 = arith.cmpi slt, %14, %15 : vector<8x128xi32>
    %cst_5 = arith.constant 0.000000e+00 : f32
    %17 = vector.broadcast %cst_5 : f32 to vector<8x128xf32>
    %18 = arith.select %16, %10, %17 : vector<8x128xi1>, vector<8x128xf32>
    %c0_6 = arith.constant 0 : index
    %c0_7 = arith.constant 0 : index
    %19 = vector.load %arg4[%c0_6, %c0_7] : memref<8x128xf32, #tpu.memory_space<vmem>>, vector<8x128xf32>
    %20 = arith.addf %19, %18 : vector<8x128xf32>
    %c0_8 = arith.constant 0 : index
    %c0_9 = arith.constant 0 : index
    %21 = vector.load %arg4[%c0_8, %c0_9] : memref<8x128xf32, #tpu.memory_space<vmem>>, vector<8x128xf32>
    tpu.vector_store %arg4[%c0_8, %c0_9], %20 {strides = array<i32>} : memref<8x128xf32, #tpu.memory_space<vmem>>, vector<8x128xf32>,
    %c0_i32_10 = arith.constant 0 : i32
    %22 = arith.cmpi eq, %arg0, %c0_i32_10 : i32
    %23 = arith.extui %22 : i1 to i32
    %c0_i32_11 = arith.constant 0 : i32
    %24 = arith.cmpi ne, %23, %c0_i32_11 : i32
    scf.if %24 {
      %c0_12 = arith.constant 0 : index
      %c0_13 = arith.constant 0 : index
      %25 = vector.load %arg4[%c0_12, %c0_13] : memref<8x128xf32, #tpu.memory_space<vmem>>, vector<8x128xf32>
      %26 = vector.shape_cast %25 : vector<8x128xf32> to vector<1x8x128xf32>
      %cst_14 = arith.constant dense<0.000000e+00> : vector<1xf32>
      %27 = vector.multi_reduction <add>, %26, %cst_14 [1, 2] : vector<1x8x128xf32> to vector<1xf32>
      %28 = vector.shape_cast %27 : vector<1xf32> to vector<1x1x1xf32>
      %29 = vector.extract %28[0, 0, 0] : f32 from vector<1x1x1xf32>
      %cst_15 = arith.constant 0.0011363636 : f32
      %30 = arith.mulf %29, %cst_15 : f32
      %c0_16 = arith.constant 0 : index
      %c0_17 = arith.constant 0 : index
      %31 = memref.load %arg3[%c0_16, %c0_17] : memref<1x1xf32, #tpu.memory_space<smem>>
      memref.store %30, %arg3[%c0_16, %c0_17] : memref<1x1xf32, #tpu.memory_space<smem>>
    } else {
    }
    return
  }
  func.func @transform_0(%arg0: i32) -> (i32, i32) {
    %c0_i32 = arith.constant 0 : i32
    %c0_i32_0 = arith.constant 0 : i32
    return %arg0, %c0_i32 : i32, i32
  }
  func.func @transform_1(%arg0: i32) -> (i32, i32) {
    %c0_i32 = arith.constant 0 : i32
    %c0_i32_0 = arith.constant 0 : i32
    return %arg0, %c0_i32 : i32, i32
  }
  func.func @transform_2(%arg0: i32) -> (i32, i32) {
    %c0_i32 = arith.constant 0 : i32
    %c0_i32_0 = arith.constant 0 : i32
    %c0_i32_1 = arith.constant 0 : i32
    return %c0_i32, %c0_i32_0 : i32, i32
  }
}

</mosaic_0001>

<llo_original>
// kernel: tpu_custom_call.1
$region0: #{tpu_custom_call.1}
  #allocation0 [shape = 'u32[]', space=smem, size = 0x4, offset = 0x4, fixed_abs, tag = 'smem constant byte address 0x4 - core index']
  #allocation1 [shape = 'u32[144,128]{1,0:T(1,128)}', space=vmem, size = 0x12000, scoped, tag = 'internal scratch']
  #allocation2 [shape = 'f32[8,128]{1,0:T(8,128)}', space=vmem, size = 0x1000, scoped, tag = 'scratch operand']
  %s0 = inlined_call_operand.hbm [shape: f32[7,128], index: 0, kind: input, shape index: {}]
  %s1 = inlined_call_operand.hbm [shape: f32[7,128], index: 1, kind: input, shape index: {}]
  %s2 = inlined_call_operand.hbm [shape: f32[1,1], index: 2, kind: output, shape index: {}]
  %s3 = sld [smem:[#allocation0]]
  $region34: #{tpu_custom_call.1} parent=0
    _
  %s5 = ssub.s32 1, %s3
  %s6 = scalar_select 0, %s5, %s3
  $region1: #{tpu_custom_call.1} parent=0
    #allocation3 [shape = 'u8[4096]{0}', space=vmem, size = 0x1000, scoped, tag = 'input window, operand 0, single buffered']
    #allocation4 [shape = 's32[1]{0}', space=sflag, size = 0x4, scoped, tag = 'scoped memory for tpu_custom_call.1']
    #allocation5 [shape = 's32[1]{0}', space=sflag, size = 0x4, scoped, tag = 'scoped memory for tpu_custom_call.1']
    #allocation6 [shape = 'u8[4096]{0}', space=vmem, size = 0x1000, scoped, tag = 'input window, operand 1, single buffered']
    #allocation7 [shape = 's32[1]{0}', space=sflag, size = 0x4, scoped, tag = 'scoped memory for tpu_custom_call.1']
    #allocation8 [shape = 'u8[512]{0}', space=smem, size = 0x200, scoped, tag = 'output window, operand 0, single buffered']
    %7 = vsyncpa [#allocation4], 0
    %8 = vsyncpa [#allocation7], 0
    %9 = vsyncpa [#allocation5], 0
    // Predicated region
    $region2: #{tpu_custom_call.1} parent=1 // pred_check
      _
    $region3: #{tpu_custom_call.1} parent=1 // pred_check_branch
      %11 = sbr.rel (0) target = $region5
    $region4: #{tpu_custom_call.1} parent=1 // pred_region
      %s13 = ssub.s32 128, 128
      %14 = vsyncadd [#allocation4], %s13
      %s16 = sshll.u32 [#allocation3], 4
      %s17 = int_to_ptr.vmem [resolvable:$true] %s16
      %19 = dma.hbm_to_vmem [thread:$0]  %s0, 128, %s17, [#allocation4]
    $region5: #{tpu_custom_call.1} parent=1 // pred_fallthru
      _
    // Predicated region
    $region6: #{tpu_custom_call.1} parent=1 // pred_check
      _
    $region7: #{tpu_custom_call.1} parent=1 // pred_check_branch
      %21 = sbr.rel (0) target = $region9
    $region8: #{tpu_custom_call.1} parent=1 // pred_region
      %s23 = ssub.s32 128, 128
      %24 = vsyncadd [#allocation7], %s23
      %s26 = sshll.u32 [#allocation6], 4
      %s27 = int_to_ptr.vmem [resolvable:$true] %s26
      %29 = dma.hbm_to_vmem [thread:$0]  %s1, 128, %s27, [#allocation7]
    $region9: #{tpu_custom_call.1} parent=1 // pred_fallthru
      _
    // Predicated region
    $region10: #{tpu_custom_call.1} parent=1 // pred_check
      _
    $region11: #{tpu_custom_call.1} parent=1 // pred_check_branch
      %31 = sbr.rel (0) target = $region13
    $region12: #{tpu_custom_call.1} parent=1 // pred_region
      %32 = dma.done [#allocation4], 128
    $region13: #{tpu_custom_call.1} parent=1 // pred_fallthru
      _
    // Predicated region
    $region14: #{tpu_custom_call.1} parent=1 // pred_check
      _
    $region15: #{tpu_custom_call.1} parent=1 // pred_check_branch
      %34 = sbr.rel (0) target = $region17
    $region16: #{tpu_custom_call.1} parent=1 // pred_region
      %35 = dma.done [#allocation7], 128
    $region17: #{tpu_custom_call.1} parent=1 // pred_fallthru
      _
    %p36 = scmp.eq.s32.totalorder 0, 0
    // Predicated region
    $region18: #{tpu_custom_call.1} parent=1 // pred_check
      %p37 = pneg %p36
    $region19: #{tpu_custom_call.1} parent=1 // pred_check_branch
      %39 = sbr.rel (%p37) target = $region21
    $region20: #{tpu_custom_call.1} parent=1 // pred_region
      %40 = vst [vmem:[#allocation2] sm:$0xff] 0.0
    $region21: #{tpu_custom_call.1} parent=1 // pred_fallthru
      _
    %v41 = vld [vmem:[#allocation3] sm:$0xff]
    %v42 = vadd.f32 %v41, 1e-06
    %v43 = vld [vmem:[#allocation6] sm:$0xff]
    %v44 = vadd.f32 %v43, 1e-06
    %v45 = vsub.f32 %v42, %v44
    %v46 = vmul.f32 %v45, %v45
    %v47 = vlaneseq
    %v48 = vshrl.u32 %v47, 7
    %s49 = smul.u32 0, 8
    %v50 = vstv %s49
    %v51 = vadd.s32 %v50, %v48
    %vm52 = vcmp.lt.s32.totalorder %v51, 7
    %v53 = vsel %vm52, %v46, 0.0
    %v54 = vld [vmem:[#allocation2] sm:$0xff]
    %v55 = vadd.f32 %v54, %v53
    %56 = vst [vmem:[#allocation2] sm:$0xff] %v55
    // Predicated region
    $region22: #{tpu_custom_call.1} parent=1 // pred_check
      %p57 = pneg %p36
    $region23: #{tpu_custom_call.1} parent=1 // pred_check_branch
      %59 = sbr.rel (%p57) target = $region25
    $region24: #{tpu_custom_call.1} parent=1 // pred_region
      %v60 = vld [vmem:[#allocation2] sm:$0xff]
      %61 = vadd.xlane.f32.xlu0 %v60
      %v62 = vpop.xlane.xlu0 %61
      %v63 = vrot.slane %v62, 4
      %v64 = vadd.f32 %v62, %v63
      %v65 = vrot.slane %v64, 2
      %v66 = vadd.f32 %v64, %v65
      %v67 = vrot.slane %v66, 1
      %v68 = vadd.f32 %v66, %v67
      %s69 = vtos %v68
      %s70 = smul.f32 %s69, 0.0011363636
      %s71 = scalar_lea.smem [#allocation8], 0
      %72 = sst [smem:[%s71]] %s70
    $region25: #{tpu_custom_call.1} parent=1 // pred_fallthru
      _
    // Predicated region
    $region26: #{tpu_custom_call.1} parent=1 // pred_check
      _
    $region27: #{tpu_custom_call.1} parent=1 // pred_check_branch
      %74 = sbr.rel (0) target = $region29
    $region28: #{tpu_custom_call.1} parent=1 // pred_region
      %s76 = ssub.s32 16, 16
      %77 = vsyncadd [#allocation5], %s76
      %80 = dma.smem_to_hbm [#allocation8], 16, %s2, [#allocation5]
    $region29: #{tpu_custom_call.1} parent=1 // pred_fallthru
      _
    // Predicated region
    $region30: #{tpu_custom_call.1} parent=1 // pred_check
      _
    $region31: #{tpu_custom_call.1} parent=1 // pred_check_branch
      %82 = sbr.rel (0) target = $region33
    $region32: #{tpu_custom_call.1} parent=1 // pred_region
      %83 = dma.done [#allocation5], 16
    $region33: #{tpu_custom_call.1} parent=1 // pred_fallthru
      _
    %84 = sfence
    %85 = vsyncpa [#allocation4], 1
    %86 = vsyncpa [#allocation7], 1
    %87 = vsyncpa [#allocation5], 1

</llo_original>
